<compile_context>
chip_gen: v7x
topology: tpu7x:2x2x1
jax: 0.10.0
libtpu: 0.0.40
codegen_flags: <defaults>
</compile_context>

<pallas_src>
import functools
import math

import jax
import jax.numpy as jnp
from jax.experimental import pallas as pl
from jax.experimental.pallas import tpu as pltpu

LANE = 128      # batch (lane) axis tiling unit
SUBLANE = 8     # feature (sublane) axis padding unit


def _round_up(x, m):
    return ((x + m - 1) // m) * m


def _fused_mlp_kernel(*refs, depth, compute_dtype=jnp.float32):
    """refs = (x_ref, w0, b0, ..., w_{depth-1}, b_{depth-1}, o_ref).

    Feature-major layout: x_ref is (d0_pad, TB) with batch on lanes; each w_i is
    (d_out_pad, d_in_pad) in PyTorch (out, in) order; each b_i is (d_out_pad, 1)
    f32 and broadcasts over the lane (batch) axis.  Zero padded weight rows/cols,
    zero bias padding and tanh(0)=0 keep padded feature rows exactly zero.
    """
    x_ref = refs[0]
    o_ref = refs[-1]
    wb = refs[1:-1]

    h = x_ref[...]                                     # (d_in_pad, TB)
    for i in range(depth):
        w = wb[2 * i][...]                             # (d_out_pad, d_in_pad)
        b = wb[2 * i + 1][...]                         # (d_out_pad, 1) f32
        z = jnp.dot(w, h, preferred_element_type=jnp.float32) + b
        if i < depth - 1:
            z = jnp.tanh(z)                            # EUP, f32
            h = z.astype(compute_dtype)
        else:
            h = z                                      # keep final layer in f32
    o_ref[...] = h.astype(o_ref.dtype)                 # lane-dense store


def init_dnn_params(key, layers):
    """Deterministic init matching torch.nn.Linear's default:
    U(-1/sqrt(fan_in), 1/sqrt(fan_in)) for both weight and bias.
    Weights kept in PyTorch layout (d_out, d_in); bias is (d_out,)."""
    params = []
    for i in range(len(layers) - 1):
        fan_in, fan_out = layers[i], layers[i + 1]
        key, kw, kb = jax.random.split(key, 3)
        bound = 1.0 / math.sqrt(fan_in)
        w = jax.random.uniform(kw, (fan_out, fan_in), jnp.float32, -bound, bound)
        b = jax.random.uniform(kb, (fan_out,), jnp.float32, -bound, bound)
        params.append((w, b))
    return params


def dnn_forward(params, x, *, batch_tile=8192, use_bf16=False):
    """Fused forward pass of DNN: one pallas_call for the whole MLP.

    x: (N, in_dim) f32.  Returns (N, out_dim) f32.
    batch_tile: number of batch elements (lanes) processed per grid step.
    use_bf16: opt-in bf16 weights/activations (f32 accumulation & tanh).
    """
    depth = len(params)
    n, in_dim = x.shape
    out_dim = params[-1][0].shape[0]
    compute_dtype = jnp.bfloat16 if use_bf16 else jnp.float32

    # Feature dims padded to sublane multiples only (2 -> 8, 32 -> 32, 1 -> 8).
    dims = [in_dim] + [w.shape[0] for (w, _) in params]
    dims_pad = [_round_up(d, SUBLANE) for d in dims]

    # Batch lives on the lane axis: pad to a lane multiple, pick a lane tile.
    n_lanes = _round_up(n, LANE)
    tb = min(_round_up(max(batch_tile, 1), LANE), n_lanes)
    # v7x has 2 TensorCores: keep >= 2 grid steps when the batch allows it so
    # dimension_semantics=("parallel",) can actually shard the batch tiles.
    if n_lanes // tb < 2 and n_lanes >= 2 * LANE:
        tb = (n_lanes // 2 // LANE) * LANE
    n_pad = _round_up(n_lanes, tb)

    # Feature-major input slab (in_pad, n_pad): only ~8 rows, a few bytes/row.
    xt = (jnp.zeros((dims_pad[0], n_pad), compute_dtype)
          .at[:in_dim, :n].set(x.T.astype(compute_dtype)))

    # Zero-padded per-layer weights/biases (tiny; DMA'd once, VMEM-resident).
    flat_wb = []
    in_specs = [pl.BlockSpec((dims_pad[0], tb), lambda i: (0, i))]
    for li, (w, b) in enumerate(params):
        do, di = w.shape
        dop, dip = dims_pad[li + 1], dims_pad[li]
        w_p = (jnp.zeros((dop, dip), compute_dtype)
               .at[:do, :di].set(w.astype(compute_dtype)))
        b_p = jnp.zeros((dop, 1), jnp.float32).at[:do, 0].set(b)
        flat_wb.extend((w_p, b_p))
        in_specs.append(pl.BlockSpec((dop, dip), lambda i: (0, 0)))   # resident
        in_specs.append(pl.BlockSpec((dop, 1), lambda i: (0, 0)))     # resident

    out_spec = pl.BlockSpec((dims_pad[-1], tb), lambda i: (0, i))

    out_padded = pl.pallas_call(
        functools.partial(_fused_mlp_kernel, depth=depth,
                          compute_dtype=compute_dtype),
        out_shape=jax.ShapeDtypeStruct((dims_pad[-1], n_pad), jnp.float32),
        grid_spec=pltpu.PrefetchScalarGridSpec(
            num_scalar_prefetch=0,
            grid=(n_pad // tb,),
            in_specs=in_specs,
            out_specs=out_spec,
        ),
        compiler_params=pltpu.CompilerParams(
            dimension_semantics=("parallel",),   # batch tiles across TCs
            vmem_limit_bytes=32 << 20,           # actual footprint is ~2 MiB
        ),
    )(xt, *flat_wb)

    # Drop feature/batch padding and return batch-major (N, out_dim).
    return out_padded[:out_dim, :n].T


def dnn_reference(params, x):
    """Pure-JAX reference (mirrors the PyTorch forward) for a sanity check."""
    out = x
    for i, (w, b) in enumerate(params):
        out = out @ w.T + b
        if i < len(params) - 1:
            out = jnp.tanh(out)
    return out


if __name__ == "__main__":
    # Burgers-style PINN MLP at small size: input (t, x) -> hidden -> hidden -> u
    layers = [2, 32, 32, 1]

    key = jax.random.PRNGKey(0)
    key, kx1, kx2 = jax.random.split(key, 3)
    params = init_dnn_params(key, layers)

    # Small batch (single 128-lane tile after padding).
    x_small = jax.random.normal(kx1, (8, layers[0]), jnp.float32)
    out_small = jax.block_until_ready(dnn_forward(params, x_small))
    ref_small = dnn_reference(params, x_small)
    assert out_small.shape == (8, layers[-1])
    assert jnp.allclose(out_small, ref_small, atol=1e-5, rtol=1e-5)

    # Larger ragged batch -> multiple lane tiles / grid steps.
    x_big = jax.random.normal(kx2, (300, layers[0]), jnp.float32)
    out_big = jax.block_until_ready(dnn_forward(params, x_big, batch_tile=128))
    ref_big = dnn_reference(params, x_big)
    assert out_big.shape == (300, layers[-1])
    assert jnp.allclose(out_big, ref_big, atol=1e-5, rtol=1e-5)

    # Opt-in bf16 path (f32 accumulation); looser tolerance vs f32 reference.
    out_bf16 = jax.block_until_ready(dnn_forward(params, x_big, use_bf16=True))
    assert out_bf16.shape == (300, layers[-1])
    assert jnp.allclose(out_bf16, ref_big, atol=5e-2, rtol=5e-2)

    print("KERNEL_OK")
</pallas_src>

<mosaic_0001>
module attributes {stable_mosaic.version = 11 : i64} {
  func.func @_fused_mlp_kernel(%arg0: i32, %arg1: memref<8x128xf32, #tpu.memory_space<vmem>>, %arg2: memref<32x8xf32, #tpu.memory_space<vmem>>, %arg3: memref<32x1xf32, #tpu.memory_space<vmem>>, %arg4: memref<32x32xf32, #tpu.memory_space<vmem>>, %arg5: memref<32x1xf32, #tpu.memory_space<vmem>>, %arg6: memref<8x32xf32, #tpu.memory_space<vmem>>, %arg7: memref<8x1xf32, #tpu.memory_space<vmem>>, %arg8: memref<8x128xf32, #tpu.memory_space<vmem>>) attributes {dimension_semantics = [#tpu.dimension_semantics<parallel>], iteration_bounds = array<i64: 1>, scalar_prefetch = 0 : i64, scratch_operands = 0 : i64, tpu.core_type = #tpu.core_type<tc>, window_params = [{transform_indices = @transform_0, window_bounds = array<i64: 8, 128>}, {pipeline_mode = #tpu.pipeline_mode<synchronous>, transform_indices = @transform_1, window_bounds = array<i64: 32, 8>}, {pipeline_mode = #tpu.pipeline_mode<synchronous>, transform_indices = @transform_2, window_bounds = array<i64: 32, 1>}, {pipeline_mode = #tpu.pipeline_mode<synchronous>, transform_indices = @transform_3, window_bounds = array<i64: 32, 32>}, {pipeline_mode = #tpu.pipeline_mode<synchronous>, transform_indices = @transform_4, window_bounds = array<i64: 32, 1>}, {pipeline_mode = #tpu.pipeline_mode<synchronous>, transform_indices = @transform_5, window_bounds = array<i64: 8, 32>}, {pipeline_mode = #tpu.pipeline_mode<synchronous>, transform_indices = @transform_6, window_bounds = array<i64: 8, 1>}, {transform_indices = @transform_7, window_bounds = array<i64: 8, 128>}]} {
    %c0 = arith.constant 0 : index
    %c0_0 = arith.constant 0 : index
    %0 = vector.load %arg1[%c0, %c0_0] : memref<8x128xf32, #tpu.memory_space<vmem>>, vector<8x128xf32>
    %c0_1 = arith.constant 0 : index
    %c0_2 = arith.constant 0 : index
    %1 = vector.load %arg2[%c0_1, %c0_2] : memref<32x8xf32, #tpu.memory_space<vmem>>, vector<32x8xf32>
    %c0_3 = arith.constant 0 : index
    %c0_4 = arith.constant 0 : index
    %2 = vector.load %arg3[%c0_3, %c0_4] : memref<32x1xf32, #tpu.memory_space<vmem>>, vector<32x1xf32>
    %cst = arith.constant dense<0.000000e+00> : vector<32x128xf32>
    %3 = tpu.matmul %1, %0, %cst {dimension_numbers = #tpu.dot_dimension_numbers<[1], [0], [0], [1], [0, 0, 1, 1], [], []>} : vector<32x8xf32>, vector<8x128xf32>, vector<32x128xf32> -> vector<32x128xf32>
    %4 = vector.broadcast %2 : vector<32x1xf32> to vector<32x128xf32>
    %5 = arith.addf %3, %4 : vector<32x128xf32>
    %6 = math.tanh %5 : vector<32x128xf32>
    %c0_5 = arith.constant 0 : index
    %c0_6 = arith.constant 0 : index
    %7 = vector.load %arg4[%c0_5, %c0_6] : memref<32x32xf32, #tpu.memory_space<vmem>>, vector<32x32xf32>
    %c0_7 = arith.constant 0 : index
    %c0_8 = arith.constant 0 : index
    %8 = vector.load %arg5[%c0_7, %c0_8] : memref<32x1xf32, #tpu.memory_space<vmem>>, vector<32x1xf32>
    %cst_9 = arith.constant dense<0.000000e+00> : vector<32x128xf32>
    %9 = tpu.matmul %7, %6, %cst_9 {dimension_numbers = #tpu.dot_dimension_numbers<[1], [0], [0], [1], [0, 0, 1, 1], [], []>} : vector<32x32xf32>, vector<32x128xf32>, vector<32x128xf32> -> vector<32x128xf32>
    %10 = vector.broadcast %8 : vector<32x1xf32> to vector<32x128xf32>
    %11 = arith.addf %9, %10 : vector<32x128xf32>
    %12 = math.tanh %11 : vector<32x128xf32>
    %c0_10 = arith.constant 0 : index
    %c0_11 = arith.constant 0 : index
    %13 = vector.load %arg6[%c0_10, %c0_11] : memref<8x32xf32, #tpu.memory_space<vmem>>, vector<8x32xf32>
    %c0_12 = arith.constant 0 : index
    %c0_13 = arith.constant 0 : index
    %14 = vector.load %arg7[%c0_12, %c0_13] : memref<8x1xf32, #tpu.memory_space<vmem>>, vector<8x1xf32>
    %cst_14 = arith.constant dense<0.000000e+00> : vector<8x128xf32>
    %15 = tpu.matmul %13, %12, %cst_14 {dimension_numbers = #tpu.dot_dimension_numbers<[1], [0], [0], [1], [0, 0, 1, 1], [], []>} : vector<8x32xf32>, vector<32x128xf32>, vector<8x128xf32> -> vector<8x128xf32>
    %16 = vector.broadcast %14 : vector<8x1xf32> to vector<8x128xf32>
    %17 = arith.addf %15, %16 : vector<8x128xf32>
    %c0_15 = arith.constant 0 : index
    %c0_16 = arith.constant 0 : index
    %18 = vector.load %arg8[%c0_15, %c0_16] : memref<8x128xf32, #tpu.memory_space<vmem>>, vector<8x128xf32>
    tpu.vector_store %arg8[%c0_15, %c0_16], %17 {strides = array<i32>} : memref<8x128xf32, #tpu.memory_space<vmem>>, vector<8x128xf32>,
    return
  }
  func.func @transform_0(%arg0: i32) -> (i32, i32) {
    %c0_i32 = arith.constant 0 : i32
    %c0_i32_0 = arith.constant 0 : i32
    return %c0_i32, %arg0 : i32, i32
  }
  func.func @transform_1(%arg0: i32) -> (i32, i32) {
    %c0_i32 = arith.constant 0 : i32
    %c0_i32_0 = arith.constant 0 : i32
    %c0_i32_1 = arith.constant 0 : i32
    return %c0_i32, %c0_i32_0 : i32, i32
  }
  func.func @transform_2(%arg0: i32) -> (i32, i32) {
    %c0_i32 = arith.constant 0 : i32
    %c0_i32_0 = arith.constant 0 : i32
    %c0_i32_1 = arith.constant 0 : i32
    return %c0_i32, %c0_i32_0 : i32, i32
  }
  func.func @transform_3(%arg0: i32) -> (i32, i32) {
    %c0_i32 = arith.constant 0 : i32
    %c0_i32_0 = arith.constant 0 : i32
    %c0_i32_1 = arith.constant 0 : i32
    return %c0_i32, %c0_i32_0 : i32, i32
  }
  func.func @transform_4(%arg0: i32) -> (i32, i32) {
    %c0_i32 = arith.constant 0 : i32
    %c0_i32_0 = arith.constant 0 : i32
    %c0_i32_1 = arith.constant 0 : i32
    return %c0_i32, %c0_i32_0 : i32, i32
  }
  func.func @transform_5(%arg0: i32) -> (i32, i32) {
    %c0_i32 = arith.constant 0 : i32
    %c0_i32_0 = arith.constant 0 : i32
    %c0_i32_1 = arith.constant 0 : i32
    return %c0_i32, %c0_i32_0 : i32, i32
  }
  func.func @transform_6(%arg0: i32) -> (i32, i32) {
    %c0_i32 = arith.constant 0 : i32
    %c0_i32_0 = arith.constant 0 : i32
    %c0_i32_1 = arith.constant 0 : i32
    return %c0_i32, %c0_i32_0 : i32, i32
  }
  func.func @transform_7(%arg0: i32) -> (i32, i32) {
    %c0_i32 = arith.constant 0 : i32
    %c0_i32_0 = arith.constant 0 : i32
    return %c0_i32, %arg0 : i32, i32
  }
}

</mosaic_0001>

<llo_original>
// kernel: tpu_custom_call.1
$region0: #{tpu_custom_call.1}
  #allocation0 [shape = 'u32[]', space=smem, size = 0x4, offset = 0x4, fixed_abs, tag = 'smem constant byte address 0x4 - core index']
  #allocation1 [shape = 'u32[144,128]{1,0:T(1,128)}', space=vmem, size = 0x12000, scoped, tag = 'internal scratch']
  %s0 = inlined_call_operand.vmem [shape: f32[8,128], index: 0, kind: input, shape index: {}]
  %s1 = inlined_call_operand.vmem [shape: f32[32,8], index: 1, kind: input, shape index: {}]
  %s2 = inlined_call_operand.vmem [shape: f32[32,1], index: 2, kind: input, shape index: {}]
  %s3 = inlined_call_operand.vmem [shape: f32[32,32], index: 3, kind: input, shape index: {}]
  %s4 = inlined_call_operand.vmem [shape: f32[32,1], index: 4, kind: input, shape index: {}]
  %s5 = inlined_call_operand.vmem [shape: f32[8,32], index: 5, kind: input, shape index: {}]
  %s6 = inlined_call_operand.vmem [shape: f32[8,1], index: 6, kind: input, shape index: {}]
  %s7 = inlined_call_operand.hbm [shape: f32[8,128], index: 7, kind: output, shape index: {}]
  %s8 = sld [smem:[#allocation0]]
  $region38: #{tpu_custom_call.1} parent=0
    _
  %s10 = ssub.s32 1, %s8
  %s11 = scalar_select 0, %s10, %s8
  $region1: #{tpu_custom_call.1} parent=0
    #allocation2 [shape = 'u8[4096]{0}', space=vmem, size = 0x1000, scoped, tag = 'output window, operand 0, single buffered']
    #allocation3 [shape = 's32[1]{0}', space=sflag, size = 0x4, scoped, tag = 'scoped memory for tpu_custom_call.1']
    %12 = vsyncpa [#allocation3], 0
    // Predicated region
    $region2: #{tpu_custom_call.1} parent=1 // pred_check
      _
    $region3: #{tpu_custom_call.1} parent=1 // pred_check_branch
      %14 = sbr.rel (0) target = $region5
    $region4: #{tpu_custom_call.1} parent=1 // pred_region
      _
    $region5: #{tpu_custom_call.1} parent=1 // pred_fallthru
      _
    // Predicated region
    $region6: #{tpu_custom_call.1} parent=1 // pred_check
      _
    $region7: #{tpu_custom_call.1} parent=1 // pred_check_branch
      %16 = sbr.rel (0) target = $region9
    $region8: #{tpu_custom_call.1} parent=1 // pred_region
      _
    $region9: #{tpu_custom_call.1} parent=1 // pred_fallthru
      _
    // Predicated region
    $region10: #{tpu_custom_call.1} parent=1 // pred_check
      _
    $region11: #{tpu_custom_call.1} parent=1 // pred_check_branch
      %18 = sbr.rel (0) target = $region13
    $region12: #{tpu_custom_call.1} parent=1 // pred_region
      _
    $region13: #{tpu_custom_call.1} parent=1 // pred_fallthru
      _
    // Predicated region
    $region14: #{tpu_custom_call.1} parent=1 // pred_check
      _
    $region15: #{tpu_custom_call.1} parent=1 // pred_check_branch
      %20 = sbr.rel (0) target = $region17
    $region16: #{tpu_custom_call.1} parent=1 // pred_region
      _
    $region17: #{tpu_custom_call.1} parent=1 // pred_fallthru
      _
    // Predicated region
    $region18: #{tpu_custom_call.1} parent=1 // pred_check
      _
    $region19: #{tpu_custom_call.1} parent=1 // pred_check_branch
      %22 = sbr.rel (0) target = $region21
    $region20: #{tpu_custom_call.1} parent=1 // pred_region
      _
    $region21: #{tpu_custom_call.1} parent=1 // pred_fallthru
      _
    // Predicated region
    $region22: #{tpu_custom_call.1} parent=1 // pred_check
      _
    $region23: #{tpu_custom_call.1} parent=1 // pred_check_branch
      %24 = sbr.rel (0) target = $region25
    $region24: #{tpu_custom_call.1} parent=1 // pred_region
      _
    $region25: #{tpu_custom_call.1} parent=1 // pred_fallthru
      _
    // Predicated region
    $region26: #{tpu_custom_call.1} parent=1 // pred_check
      _
    $region27: #{tpu_custom_call.1} parent=1 // pred_check_branch
      %26 = sbr.rel (0) target = $region29
    $region28: #{tpu_custom_call.1} parent=1 // pred_region
      _
    $region29: #{tpu_custom_call.1} parent=1 // pred_fallthru
      _
    %v27 = vld [vmem:[%s0] sm:$0xff]
    %v28 = vld [vmem:[%s1] sm:$0xff]
    %v29 = vld [vmem:[%s1 + $0x8] sm:$0xff]
    %v30 = vld [vmem:[%s1 + $0x10] sm:$0xff]
    %v31 = vld [vmem:[%s1 + $0x18] sm:$0xff]
    %v32 = vld [vmem:[%s2] sm:$0xff]
    %v33 = vld [vmem:[%s2 + $0x8] sm:$0xff]
    %v34 = vld [vmem:[%s2 + $0x10] sm:$0xff]
    %v35 = vld [vmem:[%s2 + $0x18] sm:$0xff]
    %37 = vset.pattern.permute.xlu0 0
    %38 = vperm.xlu0 %37, %v32
    %v39 = vpop.permute.xlu0 %38
    %42 = vset.pattern.permute.xlu0 0
    %43 = vperm.xlu0 %42, %v33
    %v44 = vpop.permute.xlu0 %43
    %47 = vset.pattern.permute.xlu0 0
    %48 = vperm.xlu0 %47, %v34
    %v49 = vpop.permute.xlu0 %48
    %52 = vset.pattern.permute.xlu0 0
    %53 = vperm.xlu0 %52, %v35
    %v54 = vpop.permute.xlu0 %53
    %vm56 = vcmask 64512
    %v58 = vsel %vm56, %v28, 0
    %v61 = vsel %vm56, %v29, 0
    %v64 = vsel %vm56, %v30, 0
    %v67 = vsel %vm56, %v31, 0
    %69 = vmatprep.subr.mxu0 0.0
    %70 = vmatpush1.msra.mxu0 %v27
    %71 = vmatprep.subr.mxu0 0.0
    %72 = vmatpush1.msra.mxu0 0.0
    %73 = vmatprep.subr.mxu0 0.0
    %74 = vmatpush1.msra.mxu0 0.0
    %75 = vmatprep.subr.mxu0 0.0
    %76 = vmatpush1.msra.mxu0 0.0
    %77 = vmatprep.subr.mxu0 0.0
    %78 = vmatpush1.msra.mxu0 0.0
    %79 = vmatprep.subr.mxu0 0.0
    %80 = vmatpush1.msra.mxu0 0.0
    %81 = vmatprep.subr.mxu0 0.0
    %82 = vmatpush1.msra.mxu0 0.0
    %83 = vmatprep.subr.mxu0 0.0
    %84 = vmatpush1.msra.mxu0 0.0
    %85 = vmatprep.subr.mxu0 0.0
    %86 = vmatpush1.msra.mxu0 0.0
    %87 = vmatprep.subr.mxu0 0.0
    %88 = vmatpush1.msra.mxu0 0.0
    %89 = vmatprep.subr.mxu0 0.0
    %90 = vmatpush1.msra.mxu0 0.0
    %91 = vmatprep.subr.mxu0 0.0
    %92 = vmatpush1.msra.mxu0 0.0
    %93 = vmatprep.subr.mxu0 0.0
    %94 = vmatpush1.msra.mxu0 0.0
    %95 = vmatprep.subr.mxu0 0.0
    %96 = vmatpush1.msra.mxu0 0.0
    %97 = vmatprep.subr.mxu0 0.0
    %98 = vmatpush1.msra.mxu0 0.0
    %99 = vmatprep.subr.mxu0 0.0
    %100 = vmatpush1.msra.mxu0 0.0
    %101 = vmatprep.subr.mxu0 0.0
    %102 = vmatpush1.msra.mxu0 0.0
    %103 = vmatprep.subr.mxu0 0.0
    %104 = vmatpush1.msra.mxu0 0.0
    %105 = vmatprep.subr.mxu0 0.0
    %106 = vmatpush1.msra.mxu0 0.0
    %107 = vmatprep.subr.mxu0 0.0
    %108 = vmatpush1.msra.mxu0 0.0
    %109 = vmatprep.subr.mxu0 0.0
    %110 = vmatpush1.msra.mxu0 0.0
    %111 = vmatprep.subr.mxu0 0.0
    %112 = vmatpush1.msra.mxu0 0.0
    %113 = vmatprep.subr.mxu0 0.0
    %114 = vmatpush1.msra.mxu0 0.0
    %115 = vmatprep.subr.mxu0 0.0
    %116 = vmatpush1.msra.mxu0 0.0
    %117 = vmatprep.subr.mxu0 0.0
    %118 = vmatpush1.msra.mxu0 0.0
    %119 = vmatprep.subr.mxu0 0.0
    %120 = vmatpush1.msra.mxu0 0.0
    %121 = vmatprep.subr.mxu0 0.0
    %122 = vmatpush1.msra.mxu0 0.0
    %123 = vmatprep.subr.mxu0 0.0
    %124 = vmatpush1.msra.mxu0 0.0
    %125 = vmatprep.subr.mxu0 0.0
    %126 = vmatpush1.msra.mxu0 0.0
    %127 = vmatprep.subr.mxu0 0.0
    %128 = vmatpush1.msra.mxu0 0.0
    %129 = vmatprep.subr.mxu0 0.0
    %130 = vmatpush1.msra.mxu0 0.0
    %131 = vmatprep.subr.mxu0 0.0
    %132 = vmatpush1.msra.mxu0 0.0
    %133 = vmatprep.mubr.f32.mxu0 0.0
    %134 = vmatmul.mubr.f32.gmra.mrb[0].mxu0 %v58
    %v135 = vpop.f32.mrb[0].mxu0
    %v136 = vadd.f32 %v39, %v135
    %v137 = vpop.f32.mrb[0].mxu0
    %138 = vmatprep.mubr.f32.mxu0 0.0
    %139 = vmatmul.mubr.f32.gmra.mrb[0].mxu0 %v61
    %v140 = vpop.f32.mrb[0].mxu0
    %v141 = vadd.f32 %v44, %v140
    %v142 = vpop.f32.mrb[0].mxu0
    %143 = vmatprep.mubr.f32.mxu0 0.0
    %144 = vmatmul.mubr.f32.gmra.mrb[0].mxu0 %v64
    %v145 = vpop.f32.mrb[0].mxu0
    %v146 = vadd.f32 %v49, %v145
    %v147 = vpop.f32.mrb[0].mxu0
    %148 = vmatprep.mubr.f32.mxu0 0.0
    %149 = vmatmul.mubr.f32.gmra.mrb[0].mxu0 %v67
    %v150 = vpop.f32.mrb[0].mxu0
    %v151 = vadd.f32 %v54, %v150
    %v152 = vpop.f32.mrb[0].mxu0
    %153 = vdwg.mxu0
    %v154 = vtanh.pop %v136
    %v155 = vtanh.pop %v141
    %v156 = vtanh.pop %v146
    %v157 = vtanh.pop %v151
    %v158 = vld [vmem:[%s3] sm:$0xff]
    %v159 = vld [vmem:[%s3 + $0x8] sm:$0xff]
    %v160 = vld [vmem:[%s3 + $0x10] sm:$0xff]
    %v161 = vld [vmem:[%s3 + $0x18] sm:$0xff]
    %v162 = vld [vmem:[%s4] sm:$0xff]
    %v163 = vld [vmem:[%s4 + $0x8] sm:$0xff]
    %v164 = vld [vmem:[%s4 + $0x10] sm:$0xff]
    %v165 = vld [vmem:[%s4 + $0x18] sm:$0xff]
    %167 = vset.pattern.permute.xlu0 0
    %168 = vperm.xlu0 %167, %v162
    %v169 = vpop.permute.xlu0 %168
    %172 = vset.pattern.permute.xlu0 0
    %173 = vperm.xlu0 %172, %v163
    %v174 = vpop.permute.xlu0 %173
    %177 = vset.pattern.permute.xlu0 0
    %178 = vperm.xlu0 %177, %v164
    %v179 = vpop.permute.xlu0 %178
    %182 = vset.pattern.permute.xlu0 0
    %183 = vperm.xlu0 %182, %v165
    %v184 = vpop.permute.xlu0 %183
    %vm186 = vcmask 261120
    %v188 = vsel %vm186, %v158, 0
    %v191 = vsel %vm186, %v159, 0
    %v194 = vsel %vm186, %v160, 0
    %v197 = vsel %vm186, %v161, 0
    %199 = vmatprep.subr.mxu0 0.0
    %200 = vmatpush1.msra.mxu0 %v154
    %201 = vmatprep.subr.mxu0 0.0
    %202 = vmatpush1.msra.mxu0 %v155
    %203 = vmatprep.subr.mxu0 0.0
    %204 = vmatpush1.msra.mxu0 %v156
    %205 = vmatprep.subr.mxu0 0.0
    %206 = vmatpush1.msra.mxu0 %v157
    %207 = vmatprep.subr.mxu0 0.0
    %208 = vmatpush1.msra.mxu0 0.0
    %209 = vmatprep.subr.mxu0 0.0
    %210 = vmatpush1.msra.mxu0 0.0
    %211 = vmatprep.subr.mxu0 0.0
    %212 = vmatpush1.msra.mxu0 0.0
    %213 = vmatprep.subr.mxu0 0.0
    %214 = vmatpush1.msra.mxu0 0.0
    %215 = vmatprep.subr.mxu0 0.0
    %216 = vmatpush1.msra.mxu0 0.0
    %217 = vmatprep.subr.mxu0 0.0
    %218 = vmatpush1.msra.mxu0 0.0
    %219 = vmatprep.subr.mxu0 0.0
    %220 = vmatpush1.msra.mxu0 0.0
    %221 = vmatprep.subr.mxu0 0.0
    %222 = vmatpush1.msra.mxu0 0.0
    %223 = vmatprep.subr.mxu0 0.0
    %224 = vmatpush1.msra.mxu0 0.0
    %225 = vmatprep.subr.mxu0 0.0
    %226 = vmatpush1.msra.mxu0 0.0
    %227 = vmatprep.subr.mxu0 0.0
    %228 = vmatpush1.msra.mxu0 0.0
    %229 = vmatprep.subr.mxu0 0.0
    %230 = vmatpush1.msra.mxu0 0.0
    %231 = vmatprep.subr.mxu0 0.0
    %232 = vmatpush1.msra.mxu0 0.0
    %233 = vmatprep.subr.mxu0 0.0
    %234 = vmatpush1.msra.mxu0 0.0
    %235 = vmatprep.subr.mxu0 0.0
    %236 = vmatpush1.msra.mxu0 0.0
    %237 = vmatprep.subr.mxu0 0.0
    %238 = vmatpush1.msra.mxu0 0.0
    %239 = vmatprep.subr.mxu0 0.0
    %240 = vmatpush1.msra.mxu0 0.0
    %241 = vmatprep.subr.mxu0 0.0
    %242 = vmatpush1.msra.mxu0 0.0
    %243 = vmatprep.subr.mxu0 0.0
    %244 = vmatpush1.msra.mxu0 0.0
    %245 = vmatprep.subr.mxu0 0.0
    %246 = vmatpush1.msra.mxu0 0.0
    %247 = vmatprep.subr.mxu0 0.0
    %248 = vmatpush1.msra.mxu0 0.0
    %249 = vmatprep.subr.mxu0 0.0
    %250 = vmatpush1.msra.mxu0 0.0
    %251 = vmatprep.subr.mxu0 0.0
    %252 = vmatpush1.msra.mxu0 0.0
    %253 = vmatprep.subr.mxu0 0.0
    %254 = vmatpush1.msra.mxu0 0.0
    %255 = vmatprep.subr.mxu0 0.0
    %256 = vmatpush1.msra.mxu0 0.0
    %257 = vmatprep.subr.mxu0 0.0
    %258 = vmatpush1.msra.mxu0 0.0
    %259 = vmatprep.subr.mxu0 0.0
    %260 = vmatpush1.msra.mxu0 0.0
    %261 = vmatprep.subr.mxu0 0.0
    %262 = vmatpush1.msra.mxu0 0.0
    %263 = vmatprep.mubr.f32.mxu0 0.0
    %264 = vmatmul.mubr.f32.gmra.mrb[0].mxu0 %v188
    %v265 = vpop.f32.mrb[0].mxu0
    %v266 = vadd.f32 %v169, %v265
    %v267 = vpop.f32.mrb[0].mxu0
    %268 = vmatprep.mubr.f32.mxu0 0.0
    %269 = vmatmul.mubr.f32.gmra.mrb[0].mxu0 %v191
    %v270 = vpop.f32.mrb[0].mxu0
    %v271 = vadd.f32 %v174, %v270
    %v272 = vpop.f32.mrb[0].mxu0
    %273 = vmatprep.mubr.f32.mxu0 0.0
    %274 = vmatmul.mubr.f32.gmra.mrb[0].mxu0 %v194
    %v275 = vpop.f32.mrb[0].mxu0
    %v276 = vadd.f32 %v179, %v275
    %v277 = vpop.f32.mrb[0].mxu0
    %278 = vmatprep.mubr.f32.mxu0 0.0
    %279 = vmatmul.mubr.f32.gmra.mrb[0].mxu0 %v197
    %v280 = vpop.f32.mrb[0].mxu0
    %v281 = vadd.f32 %v184, %v280
    %v282 = vpop.f32.mrb[0].mxu0
    %283 = vdwg.mxu0
    %v284 = vtanh.pop %v266
    %v285 = vtanh.pop %v271
    %v286 = vtanh.pop %v276
    %v287 = vtanh.pop %v281
    %v288 = vld [vmem:[%s5] sm:$0xff]
    %v289 = vld [vmem:[%s6] sm:$0xff]
    %291 = vset.pattern.permute.xlu0 0
    %292 = vperm.xlu0 %291, %v289
    %v293 = vpop.permute.xlu0 %292
    %v296 = vsel %vm186, %v288, 0
    %298 = vmatprep.subr.mxu0 0.0
    %299 = vmatpush1.msra.mxu0 %v284
    %300 = vmatprep.subr.mxu0 0.0
    %301 = vmatpush1.msra.mxu0 %v285
    %302 = vmatprep.subr.mxu0 0.0
    %303 = vmatpush1.msra.mxu0 %v286
    %304 = vmatprep.subr.mxu0 0.0
    %305 = vmatpush1.msra.mxu0 %v287
    %306 = vmatprep.subr.mxu0 0.0
    %307 = vmatpush1.msra.mxu0 0.0
    %308 = vmatprep.subr.mxu0 0.0
    %309 = vmatpush1.msra.mxu0 0.0
    %310 = vmatprep.subr.mxu0 0.0
    %311 = vmatpush1.msra.mxu0 0.0
    %312 = vmatprep.subr.mxu0 0.0
    %313 = vmatpush1.msra.mxu0 0.0
    %314 = vmatprep.subr.mxu0 0.0
    %315 = vmatpush1.msra.mxu0 0.0
    %316 = vmatprep.subr.mxu0 0.0
    %317 = vmatpush1.msra.mxu0 0.0
    %318 = vmatprep.subr.mxu0 0.0
    %319 = vmatpush1.msra.mxu0 0.0
    %320 = vmatprep.subr.mxu0 0.0
    %321 = vmatpush1.msra.mxu0 0.0
    %322 = vmatprep.subr.mxu0 0.0
    %323 = vmatpush1.msra.mxu0 0.0
    %324 = vmatprep.subr.mxu0 0.0
    %325 = vmatpush1.msra.mxu0 0.0
    %326 = vmatprep.subr.mxu0 0.0
    %327 = vmatpush1.msra.mxu0 0.0
    %328 = vmatprep.subr.mxu0 0.0
    %329 = vmatpush1.msra.mxu0 0.0
    %330 = vmatprep.subr.mxu0 0.0
    %331 = vmatpush1.msra.mxu0 0.0
    %332 = vmatprep.subr.mxu0 0.0
    %333 = vmatpush1.msra.mxu0 0.0
    %334 = vmatprep.subr.mxu0 0.0
    %335 = vmatpush1.msra.mxu0 0.0
    %336 = vmatprep.subr.mxu0 0.0
    %337 = vmatpush1.msra.mxu0 0.0
    %338 = vmatprep.subr.mxu0 0.0
    %339 = vmatpush1.msra.mxu0 0.0
    %340 = vmatprep.subr.mxu0 0.0
    %341 = vmatpush1.msra.mxu0 0.0
    %342 = vmatprep.subr.mxu0 0.0
    %343 = vmatpush1.msra.mxu0 0.0
    %344 = vmatprep.subr.mxu0 0.0
    %345 = vmatpush1.msra.mxu0 0.0
    %346 = vmatprep.subr.mxu0 0.0
    %347 = vmatpush1.msra.mxu0 0.0
    %348 = vmatprep.subr.mxu0 0.0
    %349 = vmatpush1.msra.mxu0 0.0
    %350 = vmatprep.subr.mxu0 0.0
    %351 = vmatpush1.msra.mxu0 0.0
    %352 = vmatprep.subr.mxu0 0.0
    %353 = vmatpush1.msra.mxu0 0.0
    %354 = vmatprep.subr.mxu0 0.0
    %355 = vmatpush1.msra.mxu0 0.0
    %356 = vmatprep.subr.mxu0 0.0
    %357 = vmatpush1.msra.mxu0 0.0
    %358 = vmatprep.subr.mxu0 0.0
    %359 = vmatpush1.msra.mxu0 0.0
    %360 = vmatprep.subr.mxu0 0.0
    %361 = vmatpush1.msra.mxu0 0.0
    %362 = vmatprep.mubr.f32.mxu0 0.0
    %363 = vmatmul.mubr.f32.gmra.mrb[0].mxu0 %v296
    %v364 = vpop.f32.mrb[0].mxu0
    %v365 = vadd.f32 %v293, %v364
    %v366 = vpop.f32.mrb[0].mxu0
    %367 = vdwg.mxu0
    %368 = vst [vmem:[#allocation2] sm:$0xff] %v365
    // Predicated region
    $region30: #{tpu_custom_call.1} parent=1 // pred_check
      _
    $region31: #{tpu_custom_call.1} parent=1 // pred_check_branch
      %370 = sbr.rel (0) target = $region33
    $region32: #{tpu_custom_call.1} parent=1 // pred_region
      %s372 = ssub.s32 128, 128
      %373 = vsyncadd [#allocation3], %s372
      %s375 = sshll.u32 [#allocation2], 4
      %s376 = int_to_ptr.vmem [resolvable:$true] %s375
      %378 = dma.vmem_to_hbm [thread:$0]  %s376, 128, %s7, [#allocation3]
    $region33: #{tpu_custom_call.1} parent=1 // pred_fallthru
      _
    // Predicated region
    $region34: #{tpu_custom_call.1} parent=1 // pred_check
      _
    $region35: #{tpu_custom_call.1} parent=1 // pred_check_branch
      %380 = sbr.rel (0) target = $region37
    $region36: #{tpu_custom_call.1} parent=1 // pred_region
      %381 = dma.done [#allocation3], 128
    $region37: #{tpu_custom_call.1} parent=1 // pred_fallthru
      _
    %382 = vsyncpa [#allocation3], 1

</llo_original>
